<compile_context>
chip_gen: v6e
topology: v6e:2x2x1
jax: 0.10.0
libtpu: 0.0.40
codegen_flags: <defaults>
</compile_context>

<pallas_src>
import functools
import math

import jax
import jax.numpy as jnp
from jax import lax
from jax.experimental import pallas as pl
from jax.experimental.pallas import tpu as pltpu


# ---------------------------------------------------------------------------
# The `pe` register_buffer (same formula as the PyTorch module).
# ---------------------------------------------------------------------------
def make_positional_encoding_table(d_model, max_len=5000, dtype=jnp.float32):
    assert d_model % 2 == 0, "PositionalEncoding assumes an even d_model"
    position = jnp.arange(max_len, dtype=jnp.float32)[:, None]
    div_term = jnp.exp(jnp.arange(0, d_model, 2, dtype=jnp.float32)
                       * (-math.log(10000.0) / d_model))
    angles = position * div_term                        # [max_len, d_model // 2]
    pe = jnp.zeros((max_len, d_model), jnp.float32)
    pe = pe.at[:, 0::2].set(jnp.sin(angles))
    pe = pe.at[:, 1::2].set(jnp.cos(angles))
    return pe.astype(dtype)


# ---------------------------------------------------------------------------
# Kernels
# ---------------------------------------------------------------------------
def _pe_add_kernel(x_ref, pe_ref, o_ref):
    # x_ref/o_ref: (bb, ts, D); pe_ref: (ts, D) broadcast over the batch dim.
    o_ref[...] = (x_ref[...] + pe_ref[...]).astype(o_ref.dtype)


_GOLDEN = 0x9E3779B9
_MIX1 = 0x7FEB352D
_MIX2 = 0x846CA68B


def _splitmix32(x):
    # Bijective 32-bit mixer; pure VPU integer ops (xor / shift / mul).
    x = (x ^ (x >> 16)) * jnp.uint32(_MIX1)
    x = (x ^ (x >> 15)) * jnp.uint32(_MIX2)
    return x ^ (x >> 16)


def _pe_add_dropout_kernel(seed_ref, x_ref, pe_ref, o_ref, *,
                           threshold, inv_keep, seq_len, d_model):
    # Fused epilogue: PE add + inverted-scale dropout, single HBM write.
    s_blk = pl.program_id(0)
    b_blk = pl.program_id(1)
    bb, ts, d = x_ref.shape

    y = x_ref[...] + pe_ref[...]

    # Grid-invariant counter-based mask: hash the global element index.
    shp = (bb, ts, d)
    bat = lax.broadcasted_iota(jnp.int32, shp, 0) + b_blk * bb
    row = lax.broadcasted_iota(jnp.int32, shp, 1) + s_blk * ts
    col = lax.broadcasted_iota(jnp.int32, shp, 2)
    idx = ((bat * seq_len + row) * d_model + col).astype(jnp.uint32)
    seed_u = seed_ref[0].astype(jnp.uint32) * jnp.uint32(_GOLDEN)
    h = _splitmix32(idx + seed_u)
    keep = h >= jnp.uint32(threshold)          # P(keep) = 1 - rate
    o_ref[...] = jnp.where(keep, y * inv_keep, 0.0).astype(o_ref.dtype)


# ---------------------------------------------------------------------------
# Wrapper
# ---------------------------------------------------------------------------
def _sublane_multiple(dtype):
    return {4: 8, 2: 16, 1: 32}.get(jnp.dtype(dtype).itemsize, 8)


def _pick_tiles(B, S, D, dtype, target_bytes=2 * 1024 * 1024):
    """Pick (seq_tile, batch_tile) so each x block is ~target_bytes (>=1 MiB)."""
    itemsize = jnp.dtype(dtype).itemsize
    align = _sublane_multiple(dtype)
    max_rows = max(align, target_bytes // max(1, D * itemsize))
    ts = min(S, 2048, max_rows)
    if ts < S:                                  # full axis is always layout-legal
        ts = max(align, (ts // align) * align)  # dtype-aware sublane alignment
    bb = max(1, min(B, target_bytes // max(1, ts * D * itemsize)))
    return ts, bb


def positional_encoding_forward(x, pe, *, dropout_rate=0.0, training=False,
                                seed=0, seq_tile=None, batch_tile=None):
    """x: [B, S, D]; pe: [max_len, D] register buffer. Returns [B, S, D]."""
    B, S, D = x.shape
    assert pe.shape[0] >= S and pe.shape[1] == D
    if pe.dtype != x.dtype:
        pe = pe.astype(x.dtype)                 # keep PE traffic at activation width

    ts, bb = _pick_tiles(B, S, D, x.dtype)
    if seq_tile is not None:
        ts = min(seq_tile, S)
    if batch_tile is not None:
        bb = min(batch_tile, B)
    # Batch tiles innermost: the (ts, D) PE block stays VMEM-resident across them.
    grid = (pl.cdiv(S, ts), pl.cdiv(B, bb))

    compiler_params = pltpu.CompilerParams(
        dimension_semantics=("parallel", "parallel"),
        vmem_limit_bytes=32 * 1024 * 1024)      # safe on v5e/v6e/v7x
    out_shape = jax.ShapeDtypeStruct((B, S, D), x.dtype)

    if training and dropout_rate > 0.0:
        threshold = min(int(round(float(dropout_rate) * 2.0 ** 32)), 2 ** 32 - 1)
        inv_keep = 1.0 / (1.0 - float(dropout_rate))
        kernel = functools.partial(_pe_add_dropout_kernel,
                                   threshold=threshold, inv_keep=inv_keep,
                                   seq_len=S, d_model=D)
        grid_spec = pltpu.PrefetchScalarGridSpec(
            num_scalar_prefetch=1,
            grid=grid,
            in_specs=[
                pl.BlockSpec((bb, ts, D), lambda s, b, seed_ref: (b, s, 0)),
                pl.BlockSpec((ts, D), lambda s, b, seed_ref: (s, 0)),
            ],
            out_specs=pl.BlockSpec((bb, ts, D), lambda s, b, seed_ref: (b, s, 0)),
        )
        seed_arr = jnp.asarray(seed, jnp.int32).reshape((1,))
        return pl.pallas_call(
            kernel, out_shape=out_shape, grid_spec=grid_spec,
            compiler_params=compiler_params,
        )(seed_arr, x, pe)

    # Eval / p == 0 path: dropout is identity.
    return pl.pallas_call(
        _pe_add_kernel,
        out_shape=out_shape,
        grid=grid,
        in_specs=[
            pl.BlockSpec((bb, ts, D), lambda s, b: (b, s, 0)),
            pl.BlockSpec((ts, D), lambda s, b: (s, 0)),
        ],
        out_specs=pl.BlockSpec((bb, ts, D), lambda s, b: (b, s, 0)),
        compiler_params=compiler_params,
    )(x, pe)


# ---------------------------------------------------------------------------
if __name__ == "__main__":
    B, S, D = 4, 64, 128          # lane-dense feature dim (multiple of 128)
    dropout_p = 0.1
    max_len = 5000                # PyTorch default

    pe = make_positional_encoding_table(D, max_len)
    x = jax.random.normal(jax.random.PRNGKey(0), (B, S, D), jnp.float32)

    # ---- eval mode (dropout == identity), jitted ----
    fwd_eval = jax.jit(functools.partial(positional_encoding_forward,
                                         dropout_rate=dropout_p, training=False))
    out = fwd_eval(x, pe)
    jax.block_until_ready(out)
    ref = x + pe[None, :S, :]
    assert out.shape == (B, S, D) and out.dtype == jnp.float32
    assert jnp.allclose(out, ref, atol=1e-5, rtol=1e-5), \
        float(jnp.max(jnp.abs(out - ref)))

    # ---- training mode (fused in-kernel dropout), jitted ----
    fwd_train = jax.jit(functools.partial(positional_encoding_forward,
                                          dropout_rate=dropout_p, training=True))
    out_tr = fwd_train(x, pe, seed=jnp.int32(123))
    jax.block_until_ready(out_tr)
    scaled = ref / (1.0 - dropout_p)
    dropped = out_tr == 0.0
    # every surviving element equals (x + pe) / (1 - p)
    assert bool(jnp.all(dropped | jnp.isclose(out_tr, scaled, atol=1e-5, rtol=1e-5)))
    drop_frac = float(jnp.mean(dropped.astype(jnp.float32)))
    assert 0.02 < drop_frac < 0.25, drop_frac   # ~= p with generous slack

    print("KERNEL_OK")
</pallas_src>

<mosaic_0001>
module attributes {stable_mosaic.version = 11 : i64} {
  func.func @_pe_add_kernel(%arg0: i32, %arg1: i32, %arg2: memref<4x64x128xf32, #tpu.memory_space<vmem>>, %arg3: memref<64x128xf32, #tpu.memory_space<vmem>>, %arg4: memref<4x64x128xf32, #tpu.memory_space<vmem>>) attributes {dimension_semantics = [#tpu.dimension_semantics<parallel>, #tpu.dimension_semantics<parallel>], iteration_bounds = array<i64: 1, 1>, scalar_prefetch = 0 : i64, scratch_operands = 0 : i64, tpu.core_type = #tpu.core_type<tc>, window_params = [{transform_indices = @transform_0, window_bounds = array<i64: 4, 64, 128>}, {transform_indices = @transform_1, window_bounds = array<i64: 64, 128>}, {transform_indices = @transform_2, window_bounds = array<i64: 4, 64, 128>}]} {
    %c0 = arith.constant 0 : index
    %c0_0 = arith.constant 0 : index
    %c0_1 = arith.constant 0 : index
    %0 = vector.load %arg2[%c0, %c0_0, %c0_1] : memref<4x64x128xf32, #tpu.memory_space<vmem>>, vector<4x64x128xf32>
    %c0_2 = arith.constant 0 : index
    %c0_3 = arith.constant 0 : index
    %1 = vector.load %arg3[%c0_2, %c0_3] : memref<64x128xf32, #tpu.memory_space<vmem>>, vector<64x128xf32>
    %2 = vector.shape_cast %1 : vector<64x128xf32> to vector<1x64x128xf32>
    %3 = vector.broadcast %2 : vector<1x64x128xf32> to vector<4x64x128xf32>
    %4 = arith.addf %0, %3 : vector<4x64x128xf32>
    %c0_4 = arith.constant 0 : index
    %c0_5 = arith.constant 0 : index
    %c0_6 = arith.constant 0 : index
    %5 = vector.load %arg4[%c0_4, %c0_5, %c0_6] : memref<4x64x128xf32, #tpu.memory_space<vmem>>, vector<4x64x128xf32>
    tpu.vector_store %arg4[%c0_4, %c0_5, %c0_6], %4 {strides = array<i32>} : memref<4x64x128xf32, #tpu.memory_space<vmem>>, vector<4x64x128xf32>,
    return
  }
  func.func @transform_0(%arg0: i32, %arg1: i32) -> (i32, i32, i32) {
    %c0_i32 = arith.constant 0 : i32
    %c0_i32_0 = arith.constant 0 : i32
    return %arg1, %arg0, %c0_i32 : i32, i32, i32
  }
  func.func @transform_1(%arg0: i32, %arg1: i32) -> (i32, i32) {
    %c0_i32 = arith.constant 0 : i32
    %c0_i32_0 = arith.constant 0 : i32
    return %arg0, %c0_i32 : i32, i32
  }
  func.func @transform_2(%arg0: i32, %arg1: i32) -> (i32, i32, i32) {
    %c0_i32 = arith.constant 0 : i32
    %c0_i32_0 = arith.constant 0 : i32
    return %arg1, %arg0, %c0_i32 : i32, i32, i32
  }
}

</mosaic_0001>

<llo_original>
// kernel: positional_encoding_forward.1
$region0: #{positional_encoding_forward.1}
  #allocation0 [shape = 'u32[]', space=smem, size = 0x4, offset = 0x4, fixed_abs, tag = 'smem constant byte address 0x4 - core index']
  #allocation1 [shape = 'u32[144,128]{1,0:T(1,128)}', space=vmem, size = 0x12000, scoped, tag = 'internal scratch']
  %s0 = inlined_call_operand.hbm [shape: f32[4,64,128], index: 0, kind: input, shape index: {}]
  %s1 = inlined_call_operand.hbm [shape: f32[5000,128], index: 1, kind: input, shape index: {}]
  %s2 = inlined_call_operand.hbm [shape: f32[4,64,128], index: 2, kind: output, shape index: {}]
  %s3 = sld [smem:[#allocation0]]
  $region26: #{positional_encoding_forward.1} parent=0
    _
  %s5 = ssub.s32 1, %s3
  %s6 = scalar_select 0, %s5, %s3
  $region1: #{positional_encoding_forward.1} parent=0
    #allocation2 [shape = 'u8[131072]{0}', space=vmem, size = 0x20000, scoped, tag = 'input window, operand 0, single buffered']
    #allocation3 [shape = 's32[1]{0}', space=sflag, size = 0x4, scoped, tag = 'scoped memory for positional_encoding_forward.1']
    #allocation4 [shape = 's32[1]{0}', space=sflag, size = 0x4, scoped, tag = 'scoped memory for positional_encoding_forward.1']
    #allocation5 [shape = 'u8[32768]{0}', space=vmem, size = 0x8000, scoped, tag = 'input window, operand 1, single buffered']
    #allocation6 [shape = 's32[1]{0}', space=sflag, size = 0x4, scoped, tag = 'scoped memory for positional_encoding_forward.1']
    #allocation7 [shape = 'u8[131072]{0}', space=vmem, size = 0x20000, scoped, tag = 'output window, operand 0, single buffered']
    %7 = vsyncpa [#allocation3], 0
    %8 = vsyncpa [#allocation6], 0
    %9 = vsyncpa [#allocation4], 0
    // Predicated region
    $region2: #{positional_encoding_forward.1} parent=1 // pred_check
      _
    $region3: #{positional_encoding_forward.1} parent=1 // pred_check_branch
      %11 = sbr.rel (0) target = $region5
    $region4: #{positional_encoding_forward.1} parent=1 // pred_region
      %s13 = ssub.s32 4096, 4096
      %14 = vsyncadd [#allocation3], %s13
      %s15 = sshll.u32 [#allocation2], 4
      %s16 = int_to_ptr.vmem [resolvable:$true] %s15
      %21 = dma.hbm_to_vmem [thread:$0]  %s0, 4096, %s16, [#allocation3], 128, 128, 8
    $region5: #{positional_encoding_forward.1} parent=1 // pred_fallthru
      _
    // Predicated region
    $region6: #{positional_encoding_forward.1} parent=1 // pred_check
      _
    $region7: #{positional_encoding_forward.1} parent=1 // pred_check_branch
      %23 = sbr.rel (0) target = $region9
    $region8: #{positional_encoding_forward.1} parent=1 // pred_region
      %s25 = ssub.s32 1024, 1024
      %26 = vsyncadd [#allocation6], %s25
      %s27 = sshll.u32 [#allocation5], 4
      %s28 = int_to_ptr.vmem [resolvable:$true] %s27
      %33 = dma.hbm_to_vmem [thread:$0]  %s1, 1024, %s28, [#allocation6], 128, 128, 8
    $region9: #{positional_encoding_forward.1} parent=1 // pred_fallthru
      _
    // Predicated region
    $region10: #{positional_encoding_forward.1} parent=1 // pred_check
      _
    $region11: #{positional_encoding_forward.1} parent=1 // pred_check_branch
      %35 = sbr.rel (0) target = $region13
    $region12: #{positional_encoding_forward.1} parent=1 // pred_region
      %36 = dma.done [#allocation3], 4096
    $region13: #{positional_encoding_forward.1} parent=1 // pred_fallthru
      _
    // Predicated region
    $region14: #{positional_encoding_forward.1} parent=1 // pred_check
      _
    $region15: #{positional_encoding_forward.1} parent=1 // pred_check_branch
      %38 = sbr.rel (0) target = $region17
    $region16: #{positional_encoding_forward.1} parent=1 // pred_region
      %39 = dma.done [#allocation6], 1024
    $region17: #{positional_encoding_forward.1} parent=1 // pred_fallthru
      _
    %v40 = vld [vmem:[#allocation2] sm:$0xff]
    %v41 = vld [vmem:[#allocation2 + $0x8] sm:$0xff]
    %v42 = vld [vmem:[#allocation2 + $0x10] sm:$0xff]
    %v43 = vld [vmem:[#allocation2 + $0x18] sm:$0xff]
    %v44 = vld [vmem:[#allocation2 + $0x20] sm:$0xff]
    %v45 = vld [vmem:[#allocation2 + $0x28] sm:$0xff]
    %v46 = vld [vmem:[#allocation2 + $0x30] sm:$0xff]
    %v47 = vld [vmem:[#allocation2 + $0x38] sm:$0xff]
    %v48 = vld [vmem:[#allocation2 + $0x40] sm:$0xff]
    %v49 = vld [vmem:[#allocation2 + $0x48] sm:$0xff]
    %v50 = vld [vmem:[#allocation2 + $0x50] sm:$0xff]
    %v51 = vld [vmem:[#allocation2 + $0x58] sm:$0xff]
    %v52 = vld [vmem:[#allocation2 + $0x60] sm:$0xff]
    %v53 = vld [vmem:[#allocation2 + $0x68] sm:$0xff]
    %v54 = vld [vmem:[#allocation2 + $0x70] sm:$0xff]
    %v55 = vld [vmem:[#allocation2 + $0x78] sm:$0xff]
    %v56 = vld [vmem:[#allocation2 + $0x80] sm:$0xff]
    %v57 = vld [vmem:[#allocation2 + $0x88] sm:$0xff]
    %v58 = vld [vmem:[#allocation2 + $0x90] sm:$0xff]
    %v59 = vld [vmem:[#allocation2 + $0x98] sm:$0xff]
    %v60 = vld [vmem:[#allocation2 + $0xa0] sm:$0xff]
    %v61 = vld [vmem:[#allocation2 + $0xa8] sm:$0xff]
    %v62 = vld [vmem:[#allocation2 + $0xb0] sm:$0xff]
    %v63 = vld [vmem:[#allocation2 + $0xb8] sm:$0xff]
    %v64 = vld [vmem:[#allocation2 + $0xc0] sm:$0xff]
    %v65 = vld [vmem:[#allocation2 + $0xc8] sm:$0xff]
    %v66 = vld [vmem:[#allocation2 + $0xd0] sm:$0xff]
    %v67 = vld [vmem:[#allocation2 + $0xd8] sm:$0xff]
    %v68 = vld [vmem:[#allocation2 + $0xe0] sm:$0xff]
    %v69 = vld [vmem:[#allocation2 + $0xe8] sm:$0xff]
    %v70 = vld [vmem:[#allocation2 + $0xf0] sm:$0xff]
    %v71 = vld [vmem:[#allocation2 + $0xf8] sm:$0xff]
    %v72 = vld [vmem:[#allocation5] sm:$0xff]
    %v73 = vld [vmem:[#allocation5 + $0x8] sm:$0xff]
    %v74 = vld [vmem:[#allocation5 + $0x10] sm:$0xff]
    %v75 = vld [vmem:[#allocation5 + $0x18] sm:$0xff]
    %v76 = vld [vmem:[#allocation5 + $0x20] sm:$0xff]
    %v77 = vld [vmem:[#allocation5 + $0x28] sm:$0xff]
    %v78 = vld [vmem:[#allocation5 + $0x30] sm:$0xff]
    %v79 = vld [vmem:[#allocation5 + $0x38] sm:$0xff]
    %v80 = vadd.f32 %v40, %v72
    %v81 = vadd.f32 %v41, %v73
    %v82 = vadd.f32 %v42, %v74
    %v83 = vadd.f32 %v43, %v75
    %v84 = vadd.f32 %v44, %v76
    %v85 = vadd.f32 %v45, %v77
    %v86 = vadd.f32 %v46, %v78
    %v87 = vadd.f32 %v47, %v79
    %v88 = vadd.f32 %v48, %v72
    %v89 = vadd.f32 %v49, %v73
    %v90 = vadd.f32 %v50, %v74
    %v91 = vadd.f32 %v51, %v75
    %v92 = vadd.f32 %v52, %v76
    %v93 = vadd.f32 %v53, %v77
    %v94 = vadd.f32 %v54, %v78
    %v95 = vadd.f32 %v55, %v79
    %v96 = vadd.f32 %v56, %v72
    %v97 = vadd.f32 %v57, %v73
    %v98 = vadd.f32 %v58, %v74
    %v99 = vadd.f32 %v59, %v75
    %v100 = vadd.f32 %v60, %v76
    %v101 = vadd.f32 %v61, %v77
    %v102 = vadd.f32 %v62, %v78
    %v103 = vadd.f32 %v63, %v79
    %v104 = vadd.f32 %v64, %v72
    %v105 = vadd.f32 %v65, %v73
    %v106 = vadd.f32 %v66, %v74
    %v107 = vadd.f32 %v67, %v75
    %v108 = vadd.f32 %v68, %v76
    %v109 = vadd.f32 %v69, %v77
    %v110 = vadd.f32 %v70, %v78
    %v111 = vadd.f32 %v71, %v79
    %112 = vst [vmem:[#allocation7] sm:$0xff] %v80
    %113 = vst [vmem:[#allocation7 + $0x8] sm:$0xff] %v81
    %114 = vst [vmem:[#allocation7 + $0x10] sm:$0xff] %v82
    %115 = vst [vmem:[#allocation7 + $0x18] sm:$0xff] %v83
    %116 = vst [vmem:[#allocation7 + $0x20] sm:$0xff] %v84
    %117 = vst [vmem:[#allocation7 + $0x28] sm:$0xff] %v85
    %118 = vst [vmem:[#allocation7 + $0x30] sm:$0xff] %v86
    %119 = vst [vmem:[#allocation7 + $0x38] sm:$0xff] %v87
    %120 = vst [vmem:[#allocation7 + $0x40] sm:$0xff] %v88
    %121 = vst [vmem:[#allocation7 + $0x48] sm:$0xff] %v89
    %122 = vst [vmem:[#allocation7 + $0x50] sm:$0xff] %v90
    %123 = vst [vmem:[#allocation7 + $0x58] sm:$0xff] %v91
    %124 = vst [vmem:[#allocation7 + $0x60] sm:$0xff] %v92
    %125 = vst [vmem:[#allocation7 + $0x68] sm:$0xff] %v93
    %126 = vst [vmem:[#allocation7 + $0x70] sm:$0xff] %v94
    %127 = vst [vmem:[#allocation7 + $0x78] sm:$0xff] %v95
    %128 = vst [vmem:[#allocation7 + $0x80] sm:$0xff] %v96
    %129 = vst [vmem:[#allocation7 + $0x88] sm:$0xff] %v97
    %130 = vst [vmem:[#allocation7 + $0x90] sm:$0xff] %v98
    %131 = vst [vmem:[#allocation7 + $0x98] sm:$0xff] %v99
    %132 = vst [vmem:[#allocation7 + $0xa0] sm:$0xff] %v100
    %133 = vst [vmem:[#allocation7 + $0xa8] sm:$0xff] %v101
    %134 = vst [vmem:[#allocation7 + $0xb0] sm:$0xff] %v102
    %135 = vst [vmem:[#allocation7 + $0xb8] sm:$0xff] %v103
    %136 = vst [vmem:[#allocation7 + $0xc0] sm:$0xff] %v104
    %137 = vst [vmem:[#allocation7 + $0xc8] sm:$0xff] %v105
    %138 = vst [vmem:[#allocation7 + $0xd0] sm:$0xff] %v106
    %139 = vst [vmem:[#allocation7 + $0xd8] sm:$0xff] %v107
    %140 = vst [vmem:[#allocation7 + $0xe0] sm:$0xff] %v108
    %141 = vst [vmem:[#allocation7 + $0xe8] sm:$0xff] %v109
    %142 = vst [vmem:[#allocation7 + $0xf0] sm:$0xff] %v110
    %143 = vst [vmem:[#allocation7 + $0xf8] sm:$0xff] %v111
    // Predicated region
    $region18: #{positional_encoding_forward.1} parent=1 // pred_check
      _
    $region19: #{positional_encoding_forward.1} parent=1 // pred_check_branch
      %145 = sbr.rel (0) target = $region21
    $region20: #{positional_encoding_forward.1} parent=1 // pred_region
      %s147 = ssub.s32 4096, 4096
      %148 = vsyncadd [#allocation4], %s147
      %s149 = sshll.u32 [#allocation7], 4
      %s150 = int_to_ptr.vmem [resolvable:$true] %s149
      %155 = dma.vmem_to_hbm [thread:$0]  %s150, 4096, %s2, [#allocation4], 128, 128, 8
    $region21: #{positional_encoding_forward.1} parent=1 // pred_fallthru
      _
    // Predicated region
    $region22: #{positional_encoding_forward.1} parent=1 // pred_check
      _
    $region23: #{positional_encoding_forward.1} parent=1 // pred_check_branch
      %157 = sbr.rel (0) target = $region25
    $region24: #{positional_encoding_forward.1} parent=1 // pred_region
      %158 = dma.done [#allocation4], 4096
    $region25: #{positional_encoding_forward.1} parent=1 // pred_fallthru
      _
    %159 = vsyncpa [#allocation3], 1
    %160 = vsyncpa [#allocation6], 1
    %161 = vsyncpa [#allocation4], 1

</llo_original>
